<compile_context>
chip_gen: v5e
topology: v5e:2x2
jax: 0.10.0
libtpu: 0.0.40
codegen_flags: <defaults>
</compile_context>

<pallas_src>
import numpy as np
import jax
import jax.numpy as jnp
from jax.experimental import pallas as pl
from jax.experimental.pallas import tpu as pltpu

NF = 32                    # conv output channels
W2 = 128                   # hidden width
K = 5                      # conv kernel size
INPUT_DIM = 22             # 20 + 1 + 1 (split sizes)
SEQ = 20                   # length of the `b` split fed to the conv
T_OUT = SEQ - K + 1        # 16, conv output length
FLAT = NF * T_OUT          # 512, l1 in_features
OUT_PAD = 128              # lane-dense padded output width
TB_MAX = 1024              # max batch tile (rows); small working set on all gens


def _net_kernel(xb_ref, weff_ref, cb_ref, w1_ref, b1_ref, w2_ref, b2_ref, out_ref):
    """Three fused MXU matmuls: conv-as-matmul + ReLU, l1 + ReLU, l2.

    xb_ref  : (TB, SEQ)       bf16 batch tile of the `b` split
    weff_ref: (SEQ, FLAT)     bf16 folded conv weight (torch flatten order)
    cb_ref  : (1, FLAT)       f32 conv bias broadcast to flatten order
    w1_ref  : (FLAT, W2)      bf16 l1 weight (transposed)
    b1_ref  : (1, W2)         f32
    w2_ref  : (W2, OUT_PAD)   bf16 l2 weight (transposed, zero-padded)
    b2_ref  : (1, OUT_PAD)    f32 (zero-padded)
    out_ref : (TB, OUT_PAD)   f32
    """
    h = jnp.dot(xb_ref[...], weff_ref[...], preferred_element_type=jnp.float32)
    h = jnp.maximum(h + cb_ref[...], 0.0)                              # relu(conv), f32
    h1 = jnp.dot(h.astype(jnp.bfloat16), w1_ref[...],
                 preferred_element_type=jnp.float32)
    h1 = jnp.maximum(h1 + b1_ref[...], 0.0)                            # relu(l1), f32
    y = jnp.dot(h1.astype(jnp.bfloat16), w2_ref[...],
                preferred_element_type=jnp.float32)
    out_ref[...] = y + b2_ref[...]                                     # l2, f32


def neural_network2_forward(x, params):
    """x: (B, INPUT_DIM) float32. Returns (B, output_dim) float32."""
    conv_w, conv_b, l1_w, l1_b, l2_w, l2_b = params
    B = x.shape[0]
    output_dim = l2_w.shape[0]
    assert output_dim <= OUT_PAD

    # torch.split(x, (20, 1, 1), -1): only `b` feeds the network.
    b_part = x[:, :SEQ].astype(jnp.float32)
    # Wo = x[:, 20:21]; v = x[:, 21:22]  -- unused, as in the module.

    # Fold Conv1d(1, NF, K) into W_eff (SEQ, FLAT), column index = c*T_OUT + t
    # (torch channel-major flatten order): W_eff[j, c*16+t] = conv_w[c, 0, j-t].
    # Index/mask construction is static (numpy) so only a cheap gather+where
    # remains at trace time.
    cw = conv_w[:, 0, :]                                    # (NF, K)
    j = np.arange(SEQ)[:, None]                             # (SEQ, 1)
    t = np.arange(T_OUT)[None, :]                           # (1, T_OUT)
    d = j - t                                               # (SEQ, T_OUT)
    valid = jnp.asarray((d >= 0) & (d < K))                 # static mask
    d_idx = np.clip(d, 0, K - 1)                            # static gather indices
    w_per_c = jnp.where(valid[None, :, :], cw[:, d_idx], 0.0)   # (NF, SEQ, T_OUT)
    w_eff = jnp.transpose(w_per_c, (1, 0, 2)).reshape(SEQ, FLAT)
    cb = jnp.repeat(conv_b, T_OUT).reshape(1, FLAT)         # cb[c*16+t] = conv_b[c]

    w1 = jnp.transpose(l1_w, (1, 0))                        # (FLAT, W2), torch flat order
    b1 = l1_b.reshape(1, W2)
    w2m = jnp.zeros((W2, OUT_PAD), jnp.float32).at[:, :output_dim].set(
        jnp.transpose(l2_w, (1, 0)))
    b2 = jnp.zeros((1, OUT_PAD), jnp.float32).at[:, :output_dim].set(l2_b)

    # Batch tiling: pad B up to a multiple of the tile (padded rows sliced off).
    TB = min(TB_MAX, ((B + 127) // 128) * 128)
    B_pad = pl.cdiv(B, TB) * TB
    xb = jnp.zeros((B_pad, SEQ), jnp.bfloat16).at[:B].set(b_part.astype(jnp.bfloat16))

    const = lambda i: (0, 0)
    out_full = pl.pallas_call(
        _net_kernel,
        out_shape=jax.ShapeDtypeStruct((B_pad, OUT_PAD), jnp.float32),
        grid=(B_pad // TB,),
        in_specs=[
            pl.BlockSpec((TB, SEQ), lambda i: (i, 0)),      # batch tile
            pl.BlockSpec((SEQ, FLAT), const),               # W_eff  (resident)
            pl.BlockSpec((1, FLAT), const),                 # cb
            pl.BlockSpec((FLAT, W2), const),                # W1
            pl.BlockSpec((1, W2), const),                   # b1
            pl.BlockSpec((W2, OUT_PAD), const),             # W2
            pl.BlockSpec((1, OUT_PAD), const),              # b2
        ],
        out_specs=pl.BlockSpec((TB, OUT_PAD), lambda i: (i, 0)),
        compiler_params=pltpu.CompilerParams(
            dimension_semantics=("parallel",)),
    )(xb, w_eff.astype(jnp.bfloat16), cb, w1.astype(jnp.bfloat16), b1,
      w2m.astype(jnp.bfloat16), b2)

    return out_full[:B, :output_dim]


def _reference(x, params):
    """Pure-JAX f32 reference mirroring the (intended) PyTorch forward."""
    conv_w, conv_b, l1_w, l1_b, l2_w, l2_b = params
    B = x.shape[0]
    b_part = x[:, :SEQ]
    patches = jnp.stack([b_part[:, k:k + T_OUT] for k in range(K)], axis=-1)  # (B,T,K)
    conv = jnp.einsum('btk,ck->bct', patches, conv_w[:, 0, :]) + conv_b[None, :, None]
    h = jax.nn.relu(conv).reshape(B, -1)          # (B, NF*T_OUT), torch flatten order
    h1 = jax.nn.relu(h @ l1_w.T + l1_b)
    return h1 @ l2_w.T + l2_b


def init_params(key, output_dim):
    ks = jax.random.split(key, 6)
    conv_w = jax.random.normal(ks[0], (NF, 1, K), jnp.float32) * 0.2
    conv_b = jax.random.normal(ks[1], (NF,), jnp.float32) * 0.05
    l1_w = jax.random.normal(ks[2], (W2, FLAT), jnp.float32) * 0.05
    l1_b = jax.random.normal(ks[3], (W2,), jnp.float32) * 0.05
    l2_w = jax.random.normal(ks[4], (output_dim, W2), jnp.float32) * 0.1
    l2_b = jax.random.normal(ks[5], (output_dim,), jnp.float32) * 0.05
    return conv_w, conv_b, l1_w, l1_b, l2_w, l2_b


if __name__ == "__main__":
    key = jax.random.PRNGKey(0)
    k_x, k_p = jax.random.split(key)
    batch = 2
    output_dim = 10
    x = jax.random.normal(k_x, (batch, INPUT_DIM), jnp.float32)
    params = init_params(k_p, output_dim)

    out = neural_network2_forward(x, params)
    out = jax.block_until_ready(out)

    ref = _reference(x, params)
    assert out.shape == (batch, output_dim)
    # Tolerance accounts for bf16 MXU matmuls (f32 accumulation) vs f32 reference.
    assert jnp.allclose(out, ref, rtol=2e-2, atol=2e-2), "mismatch vs reference"
    print("KERNEL_OK")
</pallas_src>

<mosaic_0001>
module attributes {stable_mosaic.version = 11 : i64} {
  func.func @_net_kernel(%arg0: i32, %arg1: memref<128x20xbf16, #tpu.memory_space<vmem>>, %arg2: memref<20x512xbf16, #tpu.memory_space<vmem>>, %arg3: memref<1x512xf32, #tpu.memory_space<vmem>>, %arg4: memref<512x128xbf16, #tpu.memory_space<vmem>>, %arg5: memref<1x128xf32, #tpu.memory_space<vmem>>, %arg6: memref<128x128xbf16, #tpu.memory_space<vmem>>, %arg7: memref<1x128xf32, #tpu.memory_space<vmem>>, %arg8: memref<128x128xf32, #tpu.memory_space<vmem>>) attributes {dimension_semantics = [#tpu.dimension_semantics<parallel>], iteration_bounds = array<i64: 1>, scalar_prefetch = 0 : i64, scratch_operands = 0 : i64, tpu.core_type = #tpu.core_type<tc>, window_params = [{transform_indices = @transform_0, window_bounds = array<i64: 128, 20>}, {pipeline_mode = #tpu.pipeline_mode<synchronous>, transform_indices = @transform_1, window_bounds = array<i64: 20, 512>}, {pipeline_mode = #tpu.pipeline_mode<synchronous>, transform_indices = @transform_2, window_bounds = array<i64: 1, 512>}, {pipeline_mode = #tpu.pipeline_mode<synchronous>, transform_indices = @transform_3, window_bounds = array<i64: 512, 128>}, {pipeline_mode = #tpu.pipeline_mode<synchronous>, transform_indices = @transform_4, window_bounds = array<i64: 1, 128>}, {pipeline_mode = #tpu.pipeline_mode<synchronous>, transform_indices = @transform_5, window_bounds = array<i64: 128, 128>}, {pipeline_mode = #tpu.pipeline_mode<synchronous>, transform_indices = @transform_6, window_bounds = array<i64: 1, 128>}, {transform_indices = @transform_7, window_bounds = array<i64: 128, 128>}]} {
    %c0 = arith.constant 0 : index
    %c0_0 = arith.constant 0 : index
    %0 = vector.load %arg1[%c0, %c0_0] : memref<128x20xbf16, #tpu.memory_space<vmem>>, vector<128x20xbf16>
    %c0_1 = arith.constant 0 : index
    %c0_2 = arith.constant 0 : index
    %1 = vector.load %arg2[%c0_1, %c0_2] : memref<20x512xbf16, #tpu.memory_space<vmem>>, vector<20x512xbf16>
    %cst = arith.constant dense<0.000000e+00> : vector<128x512xf32>
    %2 = tpu.matmul %0, %1, %cst {dimension_numbers = #tpu.dot_dimension_numbers<[1], [0], [0], [1], [0, 0, 1, 1], [], []>} : vector<128x20xbf16>, vector<20x512xbf16>, vector<128x512xf32> -> vector<128x512xf32>
    %c0_3 = arith.constant 0 : index
    %c0_4 = arith.constant 0 : index
    %3 = vector.load %arg3[%c0_3, %c0_4] : memref<1x512xf32, #tpu.memory_space<vmem>>, vector<1x512xf32>
    %4 = vector.broadcast %3 : vector<1x512xf32> to vector<128x512xf32>
    %5 = arith.addf %2, %4 : vector<128x512xf32>
    %cst_5 = arith.constant 0.000000e+00 : f32
    %6 = vector.broadcast %cst_5 : f32 to vector<128x512xf32>
    %7 = arith.maximumf %5, %6 : vector<128x512xf32>
    %8 = arith.truncf %7 : vector<128x512xf32> to vector<128x512xbf16>
    %c0_6 = arith.constant 0 : index
    %c0_7 = arith.constant 0 : index
    %9 = vector.load %arg4[%c0_6, %c0_7] : memref<512x128xbf16, #tpu.memory_space<vmem>>, vector<512x128xbf16>
    %cst_8 = arith.constant dense<0.000000e+00> : vector<128x128xf32>
    %10 = tpu.matmul %8, %9, %cst_8 {dimension_numbers = #tpu.dot_dimension_numbers<[1], [0], [0], [1], [0, 0, 1, 1], [], []>} : vector<128x512xbf16>, vector<512x128xbf16>, vector<128x128xf32> -> vector<128x128xf32>
    %c0_9 = arith.constant 0 : index
    %c0_10 = arith.constant 0 : index
    %11 = vector.load %arg5[%c0_9, %c0_10] : memref<1x128xf32, #tpu.memory_space<vmem>>, vector<1x128xf32>
    %12 = vector.broadcast %11 : vector<1x128xf32> to vector<128x128xf32>
    %13 = arith.addf %10, %12 : vector<128x128xf32>
    %cst_11 = arith.constant 0.000000e+00 : f32
    %14 = vector.broadcast %cst_11 : f32 to vector<128x128xf32>
    %15 = arith.maximumf %13, %14 : vector<128x128xf32>
    %16 = arith.truncf %15 : vector<128x128xf32> to vector<128x128xbf16>
    %c0_12 = arith.constant 0 : index
    %c0_13 = arith.constant 0 : index
    %17 = vector.load %arg6[%c0_12, %c0_13] : memref<128x128xbf16, #tpu.memory_space<vmem>>, vector<128x128xbf16>
    %cst_14 = arith.constant dense<0.000000e+00> : vector<128x128xf32>
    %18 = tpu.matmul %16, %17, %cst_14 {dimension_numbers = #tpu.dot_dimension_numbers<[1], [0], [0], [1], [0, 0, 1, 1], [], []>} : vector<128x128xbf16>, vector<128x128xbf16>, vector<128x128xf32> -> vector<128x128xf32>
    %c0_15 = arith.constant 0 : index
    %c0_16 = arith.constant 0 : index
    %19 = vector.load %arg7[%c0_15, %c0_16] : memref<1x128xf32, #tpu.memory_space<vmem>>, vector<1x128xf32>
    %20 = vector.broadcast %19 : vector<1x128xf32> to vector<128x128xf32>
    %21 = arith.addf %18, %20 : vector<128x128xf32>
    %c0_17 = arith.constant 0 : index
    %c0_18 = arith.constant 0 : index
    %22 = vector.load %arg8[%c0_17, %c0_18] : memref<128x128xf32, #tpu.memory_space<vmem>>, vector<128x128xf32>
    tpu.vector_store %arg8[%c0_17, %c0_18], %21 {strides = array<i32>} : memref<128x128xf32, #tpu.memory_space<vmem>>, vector<128x128xf32>,
    return
  }
  func.func @transform_0(%arg0: i32) -> (i32, i32) {
    %c0_i32 = arith.constant 0 : i32
    %c0_i32_0 = arith.constant 0 : i32
    return %arg0, %c0_i32 : i32, i32
  }
  func.func @transform_1(%arg0: i32) -> (i32, i32) {
    %c0_i32 = arith.constant 0 : i32
    %c0_i32_0 = arith.constant 0 : i32
    %c0_i32_1 = arith.constant 0 : i32
    return %c0_i32, %c0_i32_0 : i32, i32
  }
  func.func @transform_2(%arg0: i32) -> (i32, i32) {
    %c0_i32 = arith.constant 0 : i32
    %c0_i32_0 = arith.constant 0 : i32
    %c0_i32_1 = arith.constant 0 : i32
    return %c0_i32, %c0_i32_0 : i32, i32
  }
  func.func @transform_3(%arg0: i32) -> (i32, i32) {
    %c0_i32 = arith.constant 0 : i32
    %c0_i32_0 = arith.constant 0 : i32
    %c0_i32_1 = arith.constant 0 : i32
    return %c0_i32, %c0_i32_0 : i32, i32
  }
  func.func @transform_4(%arg0: i32) -> (i32, i32) {
    %c0_i32 = arith.constant 0 : i32
    %c0_i32_0 = arith.constant 0 : i32
    %c0_i32_1 = arith.constant 0 : i32
    return %c0_i32, %c0_i32_0 : i32, i32
  }
  func.func @transform_5(%arg0: i32) -> (i32, i32) {
    %c0_i32 = arith.constant 0 : i32
    %c0_i32_0 = arith.constant 0 : i32
    %c0_i32_1 = arith.constant 0 : i32
    return %c0_i32, %c0_i32_0 : i32, i32
  }
  func.func @transform_6(%arg0: i32) -> (i32, i32) {
    %c0_i32 = arith.constant 0 : i32
    %c0_i32_0 = arith.constant 0 : i32
    %c0_i32_1 = arith.constant 0 : i32
    return %c0_i32, %c0_i32_0 : i32, i32
  }
  func.func @transform_7(%arg0: i32) -> (i32, i32) {
    %c0_i32 = arith.constant 0 : i32
    %c0_i32_0 = arith.constant 0 : i32
    return %arg0, %c0_i32 : i32, i32
  }
}

</mosaic_0001>

<llo_original>
// kernel: tpu_custom_call.1
$region0: #{tpu_custom_call.1}
  #allocation0 [shape = 'u32[]', space=smem, size = 0x4, offset = 0x4, fixed_abs, tag = 'smem constant byte address 0x4 - core index']
  #allocation1 [shape = 'u32[72,128]{1,0:T(1,128)}', space=vmem, size = 0x9000, scoped, tag = 'internal scratch']
  %s0 = inlined_call_operand.vmem [shape: bf16[128,20], index: 0, kind: input, shape index: {}]
  %s1 = inlined_call_operand.hbm [shape: bf16[20,512], index: 1, kind: input, shape index: {}]
  %s2 = inlined_call_operand.vmem [shape: f32[1,512], index: 2, kind: input, shape index: {}]
  %s3 = inlined_call_operand.hbm [shape: bf16[512,128], index: 3, kind: input, shape index: {}]
  %s4 = inlined_call_operand.vmem [shape: f32[1,128], index: 4, kind: input, shape index: {}]
  %s5 = inlined_call_operand.vmem [shape: bf16[128,128], index: 5, kind: input, shape index: {}]
  %s6 = inlined_call_operand.vmem [shape: f32[1,128], index: 6, kind: input, shape index: {}]
  %s7 = inlined_call_operand.hbm [shape: f32[128,128], index: 7, kind: output, shape index: {}]
  %s8 = sld [smem:[#allocation0]]
  $region46: #{tpu_custom_call.1} parent=0
    _
  %s10 = ssub.s32 1, %s8
  %s11 = scalar_select 0, %s10, %s8
  $region1: #{tpu_custom_call.1} parent=0
    #allocation2 [shape = 'u8[24576]{0}', space=vmem, size = 0x6000, scoped, tag = 'input window, operand 1, single buffered']
    #allocation3 [shape = 's32[1]{0}', space=sflag, size = 0x4, scoped, tag = 'scoped memory for tpu_custom_call.1']
    #allocation4 [shape = 's32[1]{0}', space=sflag, size = 0x4, scoped, tag = 'scoped memory for tpu_custom_call.1']
    #allocation5 [shape = 'u8[131072]{0}', space=vmem, size = 0x20000, scoped, tag = 'input window, operand 3, single buffered']
    #allocation6 [shape = 's32[1]{0}', space=sflag, size = 0x4, scoped, tag = 'scoped memory for tpu_custom_call.1']
    #allocation7 [shape = 'u8[65536]{0}', space=vmem, size = 0x10000, scoped, tag = 'output window, operand 0, single buffered']
    %12 = vsyncpa [#allocation3], 0
    %13 = vsyncpa [#allocation6], 0
    %14 = vsyncpa [#allocation4], 0
    // Predicated region
    $region2: #{tpu_custom_call.1} parent=1 // pred_check
      _
    $region3: #{tpu_custom_call.1} parent=1 // pred_check_branch
      %16 = sbr.rel (0) target = $region5
    $region4: #{tpu_custom_call.1} parent=1 // pred_region
      _
    $region5: #{tpu_custom_call.1} parent=1 // pred_fallthru
      _
    // Predicated region
    $region6: #{tpu_custom_call.1} parent=1 // pred_check
      _
    $region7: #{tpu_custom_call.1} parent=1 // pred_check_branch
      %18 = sbr.rel (0) target = $region9
    $region8: #{tpu_custom_call.1} parent=1 // pred_region
      %20 = vsyncadd [#allocation3], 0
      %s21 = sshll.u32 %s1, 4
      %s22 = int_to_ptr.hbm [resolvable:$true] %s21
      %s23 = sshll.u32 [#allocation2], 4
      %s24 = int_to_ptr.vmem [resolvable:$true] %s23
      %29 = dma.hbm_to_vmem [thread:$0]  %s22, 768, %s24, [#allocation3], 256, 256, 16
    $region9: #{tpu_custom_call.1} parent=1 // pred_fallthru
      _
    // Predicated region
    $region10: #{tpu_custom_call.1} parent=1 // pred_check
      _
    $region11: #{tpu_custom_call.1} parent=1 // pred_check_branch
      %31 = sbr.rel (0) target = $region13
    $region12: #{tpu_custom_call.1} parent=1 // pred_region
      _
    $region13: #{tpu_custom_call.1} parent=1 // pred_fallthru
      _
    // Predicated region
    $region14: #{tpu_custom_call.1} parent=1 // pred_check
      _
    $region15: #{tpu_custom_call.1} parent=1 // pred_check_branch
      %33 = sbr.rel (0) target = $region17
    $region16: #{tpu_custom_call.1} parent=1 // pred_region
      %35 = vsyncadd [#allocation6], 0
      %s36 = sshll.u32 %s3, 4
      %s37 = int_to_ptr.hbm [resolvable:$true] %s36
      %s38 = sshll.u32 [#allocation5], 4
      %s39 = int_to_ptr.vmem [resolvable:$true] %s38
      %44 = dma.hbm_to_vmem [thread:$0]  %s37, 4096, %s39, [#allocation6], 64, 64, 4
    $region17: #{tpu_custom_call.1} parent=1 // pred_fallthru
      _
    // Predicated region
    $region18: #{tpu_custom_call.1} parent=1 // pred_check
      _
    $region19: #{tpu_custom_call.1} parent=1 // pred_check_branch
      %46 = sbr.rel (0) target = $region21
    $region20: #{tpu_custom_call.1} parent=1 // pred_region
      _
    $region21: #{tpu_custom_call.1} parent=1 // pred_fallthru
      _
    // Predicated region
    $region22: #{tpu_custom_call.1} parent=1 // pred_check
      _
    $region23: #{tpu_custom_call.1} parent=1 // pred_check_branch
      %48 = sbr.rel (0) target = $region25
    $region24: #{tpu_custom_call.1} parent=1 // pred_region
      _
    $region25: #{tpu_custom_call.1} parent=1 // pred_fallthru
      _
    // Predicated region
    $region26: #{tpu_custom_call.1} parent=1 // pred_check
      _
    $region27: #{tpu_custom_call.1} parent=1 // pred_check_branch
      %50 = sbr.rel (0) target = $region29
    $region28: #{tpu_custom_call.1} parent=1 // pred_region
      _
    $region29: #{tpu_custom_call.1} parent=1 // pred_fallthru
      _
    // Predicated region
    $region30: #{tpu_custom_call.1} parent=1 // pred_check
      _
    $region31: #{tpu_custom_call.1} parent=1 // pred_check_branch
      %52 = sbr.rel (0) target = $region33
    $region32: #{tpu_custom_call.1} parent=1 // pred_region
      %54 = dma.done [#allocation3], 768
    $region33: #{tpu_custom_call.1} parent=1 // pred_fallthru
      _
    // Predicated region
    $region34: #{tpu_custom_call.1} parent=1 // pred_check
      _
    $region35: #{tpu_custom_call.1} parent=1 // pred_check_branch
      %56 = sbr.rel (0) target = $region37
    $region36: #{tpu_custom_call.1} parent=1 // pred_region
      %58 = dma.done [#allocation6], 4096
    $region37: #{tpu_custom_call.1} parent=1 // pred_fallthru
      _
    %v60 = vld [vmem:[%s0] sm:$0xf]
    %v61 = vld [vmem:[%s0 + $0x4] sm:$0xf]
    %v62 = vld [vmem:[%s0 + $0x8] sm:$0xf]
    %v63 = vld [vmem:[%s0 + $0xc] sm:$0xf]
    %v64 = vld [vmem:[%s0 + $0x10] sm:$0xf]
    %v65 = vld [vmem:[%s0 + $0x14] sm:$0xf]
    %v66 = vld [vmem:[%s0 + $0x18] sm:$0xf]
    %v67 = vld [vmem:[%s0 + $0x1c] sm:$0xf]
    %v68 = vld [vmem:[%s0 + $0x20] sm:$0xf]
    %v69 = vld [vmem:[%s0 + $0x24] sm:$0xf]
    %v70 = vld [vmem:[%s0 + $0x28] sm:$0xf]
    %v71 = vld [vmem:[%s0 + $0x2c] sm:$0xf]
    %v72 = vld [vmem:[%s0 + $0x30] sm:$0xf]
    %v73 = vld [vmem:[%s0 + $0x34] sm:$0xf]
    %v74 = vld [vmem:[%s0 + $0x38] sm:$0xf]
    %v75 = vld [vmem:[%s0 + $0x3c] sm:$0xf]
    %v76 = vld [vmem:[#allocation2] sm:$0xff]
    %v77 = vld [vmem:[#allocation2 + $0x8] sm:$0xff]
    %v78 = vld [vmem:[#allocation2 + $0x10] sm:$0xff]
    %v79 = vld [vmem:[#allocation2 + $0x18] sm:$0xff]
    %v80 = vld [vmem:[#allocation2 + $0x20] sm:$0x33]
    %v81 = vld [vmem:[#allocation2 + $0x28] sm:$0x33]
    %v82 = vld [vmem:[%s2] sm:$0xf]
    %v84 = vperm.slane %v82, 0
    %v85 = vperm.slane %v82, 1
    %v86 = vperm.slane %v82, 2
    %v87 = vperm.slane %v82, 3
    %v108 = vunpack.c.l.b16 %v60
    %v109 = vunpack.c.l.b16 %v61
    %v110 = vunpack.c.l.b16 %v62
    %v111 = vunpack.c.l.b16 %v63
    %v112 = vunpack.c.l.b16 %v64
    %v113 = vunpack.c.l.b16 %v65
    %v114 = vunpack.c.l.b16 %v66
    %v115 = vunpack.c.l.b16 %v67
    %v116 = vunpack.c.l.b16 %v68
    %v117 = vunpack.c.l.b16 %v69
    %v118 = vunpack.c.l.b16 %v70
    %v119 = vunpack.c.l.b16 %v71
    %v120 = vunpack.c.l.b16 %v72
    %v121 = vunpack.c.l.b16 %v73
    %v122 = vunpack.c.l.b16 %v74
    %v123 = vunpack.c.l.b16 %v75
    %v124 = vpack.c.b16 %v109, %v108
    %v125 = vpack.c.b16 %v111, %v110
    %v126 = vpack.c.b16 %v113, %v112
    %v127 = vpack.c.b16 %v115, %v114
    %v128 = vpack.c.b16 %v117, %v116
    %v129 = vpack.c.b16 %v119, %v118
    %v130 = vpack.c.b16 %v121, %v120
    %v131 = vpack.c.b16 %v123, %v122
    %v138 = vunpack.c.l.b16 %v76
    %v139 = vunpack.c.h.b16 %v76
    %v140 = vunpack.c.l.b16 %v77
    %v141 = vunpack.c.h.b16 %v77
    %v142 = vunpack.c.l.b16 %v78
    %v143 = vunpack.c.h.b16 %v78
    %v144 = vunpack.c.l.b16 %v79
    %v145 = vunpack.c.h.b16 %v79
    %v146 = vunpack.c.l.b16 %v80
    %v147 = vunpack.c.h.b16 %v80
    %v148 = vunpack.c.l.b16 %v81
    %v149 = vunpack.c.h.b16 %v81
    %v150 = vpack.c.b16 %v142, %v138
    %v151 = vpack.c.b16 %v143, %v139
    %v152 = vpack.c.b16 %v144, %v140
    %v153 = vpack.c.b16 %v145, %v141
    %v154 = vpack.c.b16 %v146, %v146
    %v155 = vpack.c.b16 %v147, %v147
    %v156 = vpack.c.b16 %v148, %v148
    %v157 = vpack.c.b16 %v149, %v149
    %vm162 = vcmask 162816
    %v164 = vsel %vm162, %v124, 0
    %v167 = vsel %vm162, %v125, 0
    %v170 = vsel %vm162, %v126, 0
    %v173 = vsel %vm162, %v127, 0
    %v176 = vsel %vm162, %v128, 0
    %v179 = vsel %vm162, %v129, 0
    %v182 = vsel %vm162, %v130, 0
    %v185 = vsel %vm162, %v131, 0
    %vm187 = vcmask 1041408
    %v189 = vsel %vm187, %v154, 0
    %v192 = vsel %vm187, %v155, 0
    %v195 = vsel %vm187, %v156, 0
    %v198 = vsel %vm187, %v157, 0
    %200 = vmatpush.bf16.msra.mxu0 0
    %201 = vmatpush.bf16.msra.mxu0 0
    %202 = vmatpush.bf16.msra.mxu0 0
    %203 = vmatpush.bf16.msra.mxu0 0
    %204 = vmatpush.bf16.msra.mxu0 0
    %205 = vmatpush.bf16.msra.mxu0 0
    %206 = vmatpush.bf16.msra.mxu0 %v189
    %207 = vmatpush.bf16.msra.mxu0 %v150
    %208 = vmatmul.bf16.gmra.mxu0 %v164
    %v209 = vpop.f32.mrf.mxu0
    %v210 = vadd.f32 %v84, %v209
    %v211 = vpop.f32.mrf.mxu0
    %v212 = vadd.f32 %v84, %v211
    %213 = vmatmul.bf16.gmra.mxu0 %v167
    %v214 = vpop.f32.mrf.mxu0
    %v215 = vadd.f32 %v84, %v214
    %v216 = vpop.f32.mrf.mxu0
    %v217 = vadd.f32 %v84, %v216
    %218 = vmatmul.bf16.gmra.mxu0 %v170
    %v219 = vpop.f32.mrf.mxu0
    %v220 = vadd.f32 %v84, %v219
    %v221 = vpop.f32.mrf.mxu0
    %v222 = vadd.f32 %v84, %v221
    %223 = vmatmul.bf16.gmra.mxu0 %v173
    %v224 = vpop.f32.mrf.mxu0
    %v225 = vadd.f32 %v84, %v224
    %v226 = vpop.f32.mrf.mxu0
    %v227 = vadd.f32 %v84, %v226
    %228 = vmatmul.bf16.gmra.mxu0 %v176
    %v229 = vpop.f32.mrf.mxu0
    %v230 = vadd.f32 %v84, %v229
    %v231 = vpop.f32.mrf.mxu0
    %v232 = vadd.f32 %v84, %v231
    %233 = vmatmul.bf16.gmra.mxu0 %v179
    %v234 = vpop.f32.mrf.mxu0
    %v235 = vadd.f32 %v84, %v234
    %v236 = vpop.f32.mrf.mxu0
    %v237 = vadd.f32 %v84, %v236
    %238 = vmatmul.bf16.gmra.mxu0 %v182
    %v239 = vpop.f32.mrf.mxu0
    %v240 = vadd.f32 %v84, %v239
    %v241 = vpop.f32.mrf.mxu0
    %v242 = vadd.f32 %v84, %v241
    %243 = vmatmul.bf16.gmra.mxu0 %v185
    %v244 = vpop.f32.mrf.mxu0
    %v245 = vadd.f32 %v84, %v244
    %v246 = vpop.f32.mrf.mxu0
    %v247 = vadd.f32 %v84, %v246
    %248 = vdwg.mxu0
    %249 = vmatpush.bf16.msra.mxu0 0
    %250 = vmatpush.bf16.msra.mxu0 0
    %251 = vmatpush.bf16.msra.mxu0 0
    %252 = vmatpush.bf16.msra.mxu0 0
    %253 = vmatpush.bf16.msra.mxu0 0
    %254 = vmatpush.bf16.msra.mxu0 0
    %255 = vmatpush.bf16.msra.mxu0 %v192
    %256 = vmatpush.bf16.msra.mxu0 %v151
    %257 = vmatmul.bf16.gmra.mxu0 %v164
    %v258 = vpop.f32.mrf.mxu0
    %v259 = vadd.f32 %v85, %v258
    %v260 = vpop.f32.mrf.mxu0
    %v261 = vadd.f32 %v85, %v260
    %262 = vmatmul.bf16.gmra.mxu0 %v167
    %v263 = vpop.f32.mrf.mxu0
    %v264 = vadd.f32 %v85, %v263
    %v265 = vpop.f32.mrf.mxu0
    %v266 = vadd.f32 %v85, %v265
    %267 = vmatmul.bf16.gmra.mxu0 %v170
    %v268 = vpop.f32.mrf.mxu0
    %v269 = vadd.f32 %v85, %v268
    %v270 = vpop.f32.mrf.mxu0
    %v271 = vadd.f32 %v85, %v270
    %272 = vmatmul.bf16.gmra.mxu0 %v173
    %v273 = vpop.f32.mrf.mxu0
    %v274 = vadd.f32 %v85, %v273
    %v275 = vpop.f32.mrf.mxu0
    %v276 = vadd.f32 %v85, %v275
    %277 = vmatmul.bf16.gmra.mxu0 %v176
    %v278 = vpop.f32.mrf.mxu0
    %v279 = vadd.f32 %v85, %v278
    %v280 = vpop.f32.mrf.mxu0
    %v281 = vadd.f32 %v85, %v280
    %282 = vmatmul.bf16.gmra.mxu0 %v179
    %v283 = vpop.f32.mrf.mxu0
    %v284 = vadd.f32 %v85, %v283
    %v285 = vpop.f32.mrf.mxu0
    %v286 = vadd.f32 %v85, %v285
    %287 = vmatmul.bf16.gmra.mxu0 %v182
    %v288 = vpop.f32.mrf.mxu0
    %v289 = vadd.f32 %v85, %v288
    %v290 = vpop.f32.mrf.mxu0
    %v291 = vadd.f32 %v85, %v290
    %292 = vmatmul.bf16.gmra.mxu0 %v185
    %v293 = vpop.f32.mrf.mxu0
    %v294 = vadd.f32 %v85, %v293
    %v295 = vpop.f32.mrf.mxu0
    %v296 = vadd.f32 %v85, %v295
    %297 = vdwg.mxu0
    %298 = vmatpush.bf16.msra.mxu0 0
    %299 = vmatpush.bf16.msra.mxu0 0
    %300 = vmatpush.bf16.msra.mxu0 0
    %301 = vmatpush.bf16.msra.mxu0 0
    %302 = vmatpush.bf16.msra.mxu0 0
    %303 = vmatpush.bf16.msra.mxu0 0
    %304 = vmatpush.bf16.msra.mxu0 %v195
    %305 = vmatpush.bf16.msra.mxu0 %v152
    %306 = vmatmul.bf16.gmra.mxu0 %v164
    %v307 = vpop.f32.mrf.mxu0
    %v308 = vadd.f32 %v86, %v307
    %v309 = vpop.f32.mrf.mxu0
    %v310 = vadd.f32 %v86, %v309
    %311 = vmatmul.bf16.gmra.mxu0 %v167
    %v312 = vpop.f32.mrf.mxu0
    %v313 = vadd.f32 %v86, %v312
    %v314 = vpop.f32.mrf.mxu0
    %v315 = vadd.f32 %v86, %v314
    %316 = vmatmul.bf16.gmra.mxu0 %v170
    %v317 = vpop.f32.mrf.mxu0
    %v318 = vadd.f32 %v86, %v317
    %v319 = vpop.f32.mrf.mxu0
    %v320 = vadd.f32 %v86, %v319
    %321 = vmatmul.bf16.gmra.mxu0 %v173
    %v322 = vpop.f32.mrf.mxu0
    %v323 = vadd.f32 %v86, %v322
    %v324 = vpop.f32.mrf.mxu0
    %v325 = vadd.f32 %v86, %v324
    %326 = vmatmul.bf16.gmra.mxu0 %v176
    %v327 = vpop.f32.mrf.mxu0
    %v328 = vadd.f32 %v86, %v327
    %v329 = vpop.f32.mrf.mxu0
    %v330 = vadd.f32 %v86, %v329
    %331 = vmatmul.bf16.gmra.mxu0 %v179
    %v332 = vpop.f32.mrf.mxu0
    %v333 = vadd.f32 %v86, %v332
    %v334 = vpop.f32.mrf.mxu0
    %v335 = vadd.f32 %v86, %v334
    %336 = vmatmul.bf16.gmra.mxu0 %v182
    %v337 = vpop.f32.mrf.mxu0
    %v338 = vadd.f32 %v86, %v337
    %v339 = vpop.f32.mrf.mxu0
    %v340 = vadd.f32 %v86, %v339
    %341 = vmatmul.bf16.gmra.mxu0 %v185
    %v342 = vpop.f32.mrf.mxu0
    %v343 = vadd.f32 %v86, %v342
    %v344 = vpop.f32.mrf.mxu0
    %v345 = vadd.f32 %v86, %v344
    %346 = vdwg.mxu0
    %347 = vmatpush.bf16.msra.mxu0 0
    %348 = vmatpush.bf16.msra.mxu0 0
    %349 = vmatpush.bf16.msra.mxu0 0
    %350 = vmatpush.bf16.msra.mxu0 0
    %351 = vmatpush.bf16.msra.mxu0 0
    %352 = vmatpush.bf16.msra.mxu0 0
    %353 = vmatpush.bf16.msra.mxu0 %v198
    %354 = vmatpush.bf16.msra.mxu0 %v153
    %355 = vmatmul.bf16.gmra.mxu0 %v164
    %v356 = vpop.f32.mrf.mxu0
    %v357 = vadd.f32 %v87, %v356
    %v358 = vpop.f32.mrf.mxu0
    %v359 = vadd.f32 %v87, %v358
    %360 = vmatmul.bf16.gmra.mxu0 %v167
    %v361 = vpop.f32.mrf.mxu0
    %v362 = vadd.f32 %v87, %v361
    %v363 = vpop.f32.mrf.mxu0
    %v364 = vadd.f32 %v87, %v363
    %365 = vmatmul.bf16.gmra.mxu0 %v170
    %v366 = vpop.f32.mrf.mxu0
    %v367 = vadd.f32 %v87, %v366
    %v368 = vpop.f32.mrf.mxu0
    %v369 = vadd.f32 %v87, %v368
    %370 = vmatmul.bf16.gmra.mxu0 %v173
    %v371 = vpop.f32.mrf.mxu0
    %v372 = vadd.f32 %v87, %v371
    %v373 = vpop.f32.mrf.mxu0
    %v374 = vadd.f32 %v87, %v373
    %375 = vmatmul.bf16.gmra.mxu0 %v176
    %v376 = vpop.f32.mrf.mxu0
    %v377 = vadd.f32 %v87, %v376
    %v378 = vpop.f32.mrf.mxu0
    %v379 = vadd.f32 %v87, %v378
    %380 = vmatmul.bf16.gmra.mxu0 %v179
    %v381 = vpop.f32.mrf.mxu0
    %v382 = vadd.f32 %v87, %v381
    %v383 = vpop.f32.mrf.mxu0
    %v384 = vadd.f32 %v87, %v383
    %385 = vmatmul.bf16.gmra.mxu0 %v182
    %v386 = vpop.f32.mrf.mxu0
    %v387 = vadd.f32 %v87, %v386
    %v388 = vpop.f32.mrf.mxu0
    %v389 = vadd.f32 %v87, %v388
    %390 = vmatmul.bf16.gmra.mxu0 %v185
    %v391 = vpop.f32.mrf.mxu0
    %v392 = vadd.f32 %v87, %v391
    %v393 = vpop.f32.mrf.mxu0
    %v394 = vadd.f32 %v87, %v393
    %395 = vdwg.mxu0
    %v396 = vmax.f32 %v210, 0.0
    %v397 = vmax.f32 %v259, 0.0
    %v398 = vmax.f32 %v308, 0.0
    %v399 = vmax.f32 %v357, 0.0
    %v400 = vmax.f32 %v212, 0.0
    %v401 = vmax.f32 %v261, 0.0
    %v402 = vmax.f32 %v310, 0.0
    %v403 = vmax.f32 %v359, 0.0
    %v404 = vmax.f32 %v215, 0.0
    %v405 = vmax.f32 %v264, 0.0
    %v406 = vmax.f32 %v313, 0.0
    %v407 = vmax.f32 %v362, 0.0
    %v408 = vmax.f32 %v217, 0.0
    %v409 = vmax.f32 %v266, 0.0
    %v410 = vmax.f32 %v315, 0.0
    %v411 = vmax.f32 %v364, 0.0
    %v412 = vmax.f32 %v220, 0.0
    %v413 = vmax.f32 %v269, 0.0
    %v414 = vmax.f32 %v318, 0.0
    %v415 = vmax.f32 %v367, 0.0
    %v416 = vmax.f32 %v222, 0.0
    %v417 = vmax.f32 %v271, 0.0
    %v418 = vmax.f32 %v320, 0.0
    %v419 = vmax.f32 %v369, 0.0
    %v420 = vmax.f32 %v225, 0.0
    %v421 = vmax.f32 %v274, 0.0
    %v422 = vmax.f32 %v323, 0.0
    %v423 = vmax.f32 %v372, 0.0
    %v424 = vmax.f32 %v227, 0.0
    %v425 = vmax.f32 %v276, 0.0
    %v426 = vmax.f32 %v325, 0.0
    %v427 = vmax.f32 %v374, 0.0
    %v428 = vmax.f32 %v230, 0.0
    %v429 = vmax.f32 %v279, 0.0
    %v430 = vmax.f32 %v328, 0.0
    %v431 = vmax.f32 %v377, 0.0
    %v432 = vmax.f32 %v232, 0.0
    %v433 = vmax.f32 %v281, 0.0
    %v434 = vmax.f32 %v330, 0.0
    %v435 = vmax.f32 %v379, 0.0
    %v436 = vmax.f32 %v235, 0.0
    %v437 = vmax.f32 %v284, 0.0
    %v438 = vmax.f32 %v333, 0.0
    %v439 = vmax.f32 %v382, 0.0
    %v440 = vmax.f32 %v237, 0.0
    %v441 = vmax.f32 %v286, 0.0
    %v442 = vmax.f32 %v335, 0.0
    %v443 = vmax.f32 %v384, 0.0
    %v444 = vmax.f32 %v240, 0.0
    %v445 = vmax.f32 %v289, 0.0
    %v446 = vmax.f32 %v338, 0.0
    %v447 = vmax.f32 %v387, 0.0
    %v448 = vmax.f32 %v242, 0.0
    %v449 = vmax.f32 %v291, 0.0
    %v450 = vmax.f32 %v340, 0.0
    %v451 = vmax.f32 %v389, 0.0
    %v452 = vmax.f32 %v245, 0.0
    %v453 = vmax.f32 %v294, 0.0
    %v454 = vmax.f32 %v343, 0.0
    %v455 = vmax.f32 %v392, 0.0
    %v456 = vmax.f32 %v247, 0.0
    %v457 = vmax.f32 %v296, 0.0
    %v458 = vmax.f32 %v345, 0.0
    %v459 = vmax.f32 %v394, 0.0
    %v460 = vpack.c.bf16 %v400, %v396
    %v461 = vpack.c.bf16 %v401, %v397
    %v462 = vpack.c.bf16 %v402, %v398
    %v463 = vpack.c.bf16 %v403, %v399
    %v464 = vpack.c.bf16 %v408, %v404
    %v465 = vpack.c.bf16 %v409, %v405
    %v466 = vpack.c.bf16 %v410, %v406
    %v467 = vpack.c.bf16 %v411, %v407
    %v468 = vpack.c.bf16 %v416, %v412
    %v469 = vpack.c.bf16 %v417, %v413
    %v470 = vpack.c.bf16 %v418, %v414
    %v471 = vpack.c.bf16 %v419, %v415
    %v472 = vpack.c.bf16 %v424, %v420
    %v473 = vpack.c.bf16 %v425, %v421
    %v474 = vpack.c.bf16 %v426, %v422
    %v475 = vpack.c.bf16 %v427, %v423
    %v476 = vpack.c.bf16 %v432, %v428
    %v477 = vpack.c.bf16 %v433, %v429
    %v478 = vpack.c.bf16 %v434, %v430
    %v479 = vpack.c.bf16 %v435, %v431
    %v480 = vpack.c.bf16 %v440, %v436
    %v481 = vpack.c.bf16 %v441, %v437
    %v482 = vpack.c.bf16 %v442, %v438
    %v483 = vpack.c.bf16 %v443, %v439
    %v484 = vpack.c.bf16 %v448, %v444
    %v485 = vpack.c.bf16 %v449, %v445
    %v486 = vpack.c.bf16 %v450, %v446
    %v487 = vpack.c.bf16 %v451, %v447
    %v488 = vpack.c.bf16 %v456, %v452
    %v489 = vpack.c.bf16 %v457, %v453
    %v490 = vpack.c.bf16 %v458, %v454
    %v491 = vpack.c.bf16 %v459, %v455
    %v492 = vld [vmem:[#allocation5] sm:$0xf]
    %v493 = vld [vmem:[#allocation5 + $0x4] sm:$0xf]
    %v494 = vld [vmem:[#allocation5 + $0x8] sm:$0xf]
    %v495 = vld [vmem:[#allocation5 + $0xc] sm:$0xf]
    %v496 = vld [vmem:[#allocation5 + $0x10] sm:$0xf]
    %v497 = vld [vmem:[#allocation5 + $0x14] sm:$0xf]
    %v498 = vld [vmem:[#allocation5 + $0x18] sm:$0xf]
    %v499 = vld [vmem:[#allocation5 + $0x1c] sm:$0xf]
    %v500 = vld [vmem:[#allocation5 + $0x20] sm:$0xf]
    %v501 = vld [vmem:[#allocation5 + $0x24] sm:$0xf]
    %v502 = vld [vmem:[#allocation5 + $0x28] sm:$0xf]
    %v503 = vld [vmem:[#allocation5 + $0x2c] sm:$0xf]
    %v504 = vld [vmem:[#allocation5 + $0x30] sm:$0xf]
    %v505 = vld [vmem:[#allocation5 + $0x34] sm:$0xf]
    %v506 = vld [vmem:[#allocation5 + $0x38] sm:$0xf]
    %v507 = vld [vmem:[#allocation5 + $0x3c] sm:$0xf]
    %v508 = vld [vmem:[#allocation5 + $0x40] sm:$0xf]
    %v509 = vld [vmem:[#allocation5 + $0x44] sm:$0xf]
    %v510 = vld [vmem:[#allocation5 + $0x48] sm:$0xf]
    %v511 = vld [vmem:[#allocation5 + $0x4c] sm:$0xf]
    %v512 = vld [vmem:[#allocation5 + $0x50] sm:$0xf]
    %v513 = vld [vmem:[#allocation5 + $0x54] sm:$0xf]
    %v514 = vld [vmem:[#allocation5 + $0x58] sm:$0xf]
    %v515 = vld [vmem:[#allocation5 + $0x5c] sm:$0xf]
    %v516 = vld [vmem:[#allocation5 + $0x60] sm:$0xf]
    %v517 = vld [vmem:[#allocation5 + $0x64] sm:$0xf]
    %v518 = vld [vmem:[#allocation5 + $0x68] sm:$0xf]
    %v519 = vld [vmem:[#allocation5 + $0x6c] sm:$0xf]
    %v520 = vld [vmem:[#allocation5 + $0x70] sm:$0xf]
    %v521 = vld [vmem:[#allocation5 + $0x74] sm:$0xf]
    %v522 = vld [vmem:[#allocation5 + $0x78] sm:$0xf]
    %v523 = vld [vmem:[#allocation5 + $0x7c] sm:$0xf]
    %v524 = vld [vmem:[#allocation5 + $0x80] sm:$0xf]
    %v525 = vld [vmem:[#allocation5 + $0x84] sm:$0xf]
    %v526 = vld [vmem:[#allocation5 + $0x88] sm:$0xf]
    %v527 = vld [vmem:[#allocation5 + $0x8c] sm:$0xf]
    %v528 = vld [vmem:[#allocation5 + $0x90] sm:$0xf]
    %v529 = vld [vmem:[#allocation5 + $0x94] sm:$0xf]
    %v530 = vld [vmem:[#allocation5 + $0x98] sm:$0xf]
    %v531 = vld [vmem:[#allocation5 + $0x9c] sm:$0xf]
    %v532 = vld [vmem:[#allocation5 + $0xa0] sm:$0xf]
    %v533 = vld [vmem:[#allocation5 + $0xa4] sm:$0xf]
    %v534 = vld [vmem:[#allocation5 + $0xa8] sm:$0xf]
    %v535 = vld [vmem:[#allocation5 + $0xac] sm:$0xf]
    %v536 = vld [vmem:[#allocation5 + $0xb0] sm:$0xf]
    %v537 = vld [vmem:[#allocation5 + $0xb4] sm:$0xf]
    %v538 = vld [vmem:[#allocation5 + $0xb8] sm:$0xf]
    %v539 = vld [vmem:[#allocation5 + $0xbc] sm:$0xf]
    %v540 = vld [vmem:[#allocation5 + $0xc0] sm:$0xf]
    %v541 = vld [vmem:[#allocation5 + $0xc4] sm:$0xf]
    %v542 = vld [vmem:[#allocation5 + $0xc8] sm:$0xf]
    %v543 = vld [vmem:[#allocation5 + $0xcc] sm:$0xf]
    %v544 = vld [vmem:[#allocation5 + $0xd0] sm:$0xf]
    %v545 = vld [vmem:[#allocation5 + $0xd4] sm:$0xf]
    %v546 = vld [vmem:[#allocation5 + $0xd8] sm:$0xf]
    %v547 = vld [vmem:[#allocation5 + $0xdc] sm:$0xf]
    %v548 = vld [vmem:[#allocation5 + $0xe0] sm:$0xf]
    %v549 = vld [vmem:[#allocation5 + $0xe4] sm:$0xf]
    %v550 = vld [vmem:[#allocation5 + $0xe8] sm:$0xf]
    %v551 = vld [vmem:[#allocation5 + $0xec] sm:$0xf]
    %v552 = vld [vmem:[#allocation5 + $0xf0] sm:$0xf]
    %v553 = vld [vmem:[#allocation5 + $0xf4] sm:$0xf]
    %v554 = vld [vmem:[#allocation5 + $0xf8] sm:$0xf]
    %v555 = vld [vmem:[#allocation5 + $0xfc] sm:$0xf]
    %v556 = vld [vmem:[%s4] sm:$0x1]
    %v558 = vperm.slane %v556, 0
    %v624 = vunpack.c.l.b16 %v492
    %v625 = vunpack.c.l.b16 %v493
    %v626 = vunpack.c.l.b16 %v494
    %v627 = vunpack.c.l.b16 %v495
    %v628 = vunpack.c.l.b16 %v496
    %v629 = vunpack.c.l.b16 %v497
    %v630 = vunpack.c.l.b16 %v498
    %v631 = vunpack.c.l.b16 %v499
    %v632 = vunpack.c.l.b16 %v500
    %v633 = vunpack.c.l.b16 %v501
    %v634 = vunpack.c.l.b16 %v502
    %v635 = vunpack.c.l.b16 %v503
    %v636 = vunpack.c.l.b16 %v504
    %v637 = vunpack.c.l.b16 %v505
    %v638 = vunpack.c.l.b16 %v506
    %v639 = vunpack.c.l.b16 %v507
    %v640 = vunpack.c.l.b16 %v508
    %v641 = vunpack.c.l.b16 %v509
    %v642 = vunpack.c.l.b16 %v510
    %v643 = vunpack.c.l.b16 %v511
    %v644 = vunpack.c.l.b16 %v512
    %v645 = vunpack.c.l.b16 %v513
    %v646 = vunpack.c.l.b16 %v514
    %v647 = vunpack.c.l.b16 %v515
    %v648 = vunpack.c.l.b16 %v516
    %v649 = vunpack.c.l.b16 %v517
    %v650 = vunpack.c.l.b16 %v518
    %v651 = vunpack.c.l.b16 %v519
    %v652 = vunpack.c.l.b16 %v520
    %v653 = vunpack.c.l.b16 %v521
    %v654 = vunpack.c.l.b16 %v522
    %v655 = vunpack.c.l.b16 %v523
    %v656 = vunpack.c.l.b16 %v524
    %v657 = vunpack.c.l.b16 %v525
    %v658 = vunpack.c.l.b16 %v526
    %v659 = vunpack.c.l.b16 %v527
    %v660 = vunpack.c.l.b16 %v528
    %v661 = vunpack.c.l.b16 %v529
    %v662 = vunpack.c.l.b16 %v530
    %v663 = vunpack.c.l.b16 %v531
    %v664 = vunpack.c.l.b16 %v532
    %v665 = vunpack.c.l.b16 %v533
    %v666 = vunpack.c.l.b16 %v534
    %v667 = vunpack.c.l.b16 %v535
    %v668 = vunpack.c.l.b16 %v536
    %v669 = vunpack.c.l.b16 %v537
    %v670 = vunpack.c.l.b16 %v538
    %v671 = vunpack.c.l.b16 %v539
    %v672 = vunpack.c.l.b16 %v540
    %v673 = vunpack.c.l.b16 %v541
    %v674 = vunpack.c.l.b16 %v542
    %v675 = vunpack.c.l.b16 %v543
    %v676 = vunpack.c.l.b16 %v544
    %v677 = vunpack.c.l.b16 %v545
    %v678 = vunpack.c.l.b16 %v546
    %v679 = vunpack.c.l.b16 %v547
    %v680 = vunpack.c.l.b16 %v548
    %v681 = vunpack.c.l.b16 %v549
    %v682 = vunpack.c.l.b16 %v550
    %v683 = vunpack.c.l.b16 %v551
    %v684 = vunpack.c.l.b16 %v552
    %v685 = vunpack.c.l.b16 %v553
    %v686 = vunpack.c.l.b16 %v554
    %v687 = vunpack.c.l.b16 %v555
    %v688 = vpack.c.b16 %v625, %v624
    %v689 = vpack.c.b16 %v627, %v626
    %v690 = vpack.c.b16 %v629, %v628
    %v691 = vpack.c.b16 %v631, %v630
    %v692 = vpack.c.b16 %v633, %v632
    %v693 = vpack.c.b16 %v635, %v634
    %v694 = vpack.c.b16 %v637, %v636
    %v695 = vpack.c.b16 %v639, %v638
    %v696 = vpack.c.b16 %v641, %v640
    %v697 = vpack.c.b16 %v643, %v642
    %v698 = vpack.c.b16 %v645, %v644
    %v699 = vpack.c.b16 %v647, %v646
    %v700 = vpack.c.b16 %v649, %v648
    %v701 = vpack.c.b16 %v651, %v650
    %v702 = vpack.c.b16 %v653, %v652
    %v703 = vpack.c.b16 %v655, %v654
    %v704 = vpack.c.b16 %v657, %v656
    %v705 = vpack.c.b16 %v659, %v658
    %v706 = vpack.c.b16 %v661, %v660
    %v707 = vpack.c.b16 %v663, %v662
    %v708 = vpack.c.b16 %v665, %v664
    %v709 = vpack.c.b16 %v667, %v666
    %v710 = vpack.c.b16 %v669, %v668
    %v711 = vpack.c.b16 %v671, %v670
    %v712 = vpack.c.b16 %v673, %v672
    %v713 = vpack.c.b16 %v675, %v674
    %v714 = vpack.c.b16 %v677, %v676
    %v715 = vpack.c.b16 %v679, %v678
    %v716 = vpack.c.b16 %v681, %v680
    %v717 = vpack.c.b16 %v683, %v682
    %v718 = vpack.c.b16 %v685, %v684
    %v719 = vpack.c.b16 %v687, %v686
    %752 = vmatpush.bf16.msra.mxu0 %v695
    %753 = vmatpush.bf16.msra.mxu0 %v694
    %754 = vmatpush.bf16.msra.mxu0 %v693
    %755 = vmatpush.bf16.msra.mxu0 %v692
    %756 = vmatpush.bf16.msra.mxu0 %v691
    %757 = vmatpush.bf16.msra.mxu0 %v690
    %758 = vmatpush.bf16.msra.mxu0 %v689
    %759 = vmatpush.bf16.msra.mxu0 %v688
    %760 = vmatmul.bf16.gmra.mxu0 %v460
    %v761 = vpop.f32.mrf.mxu0
    %v762 = vadd.f32 %v558, %v761
    %v763 = vpop.f32.mrf.mxu0
    %v764 = vadd.f32 %v558, %v763
    %765 = vmatmul.bf16.gmra.mxu0 %v464
    %v766 = vpop.f32.mrf.mxu0
    %v767 = vadd.f32 %v558, %v766
    %v768 = vpop.f32.mrf.mxu0
    %v769 = vadd.f32 %v558, %v768
    %770 = vmatmul.bf16.gmra.mxu0 %v468
    %v771 = vpop.f32.mrf.mxu0
    %v772 = vadd.f32 %v558, %v771
    %v773 = vpop.f32.mrf.mxu0
    %v774 = vadd.f32 %v558, %v773
    %775 = vmatmul.bf16.gmra.mxu0 %v472
    %v776 = vpop.f32.mrf.mxu0
    %v777 = vadd.f32 %v558, %v776
    %v778 = vpop.f32.mrf.mxu0
    %v779 = vadd.f32 %v558, %v778
    %780 = vmatmul.bf16.gmra.mxu0 %v476
    %v781 = vpop.f32.mrf.mxu0
    %v782 = vadd.f32 %v558, %v781
    %v783 = vpop.f32.mrf.mxu0
    %v784 = vadd.f32 %v558, %v783
    %785 = vmatmul.bf16.gmra.mxu0 %v480
    %v786 = vpop.f32.mrf.mxu0
    %v787 = vadd.f32 %v558, %v786
    %v788 = vpop.f32.mrf.mxu0
    %v789 = vadd.f32 %v558, %v788
    %790 = vmatmul.bf16.gmra.mxu0 %v484
    %v791 = vpop.f32.mrf.mxu0
    %v792 = vadd.f32 %v558, %v791
    %v793 = vpop.f32.mrf.mxu0
    %v794 = vadd.f32 %v558, %v793
    %795 = vmatmul.bf16.gmra.mxu0 %v488
    %v796 = vpop.f32.mrf.mxu0
    %v797 = vadd.f32 %v558, %v796
    %v798 = vpop.f32.mrf.mxu0
    %v799 = vadd.f32 %v558, %v798
    %800 = vdwg.mxu0
    %801 = vmatpush.bf16.msra.mxu0 %v703
    %802 = vmatpush.bf16.msra.mxu0 %v702
    %803 = vmatpush.bf16.msra.mxu0 %v701
    %804 = vmatpush.bf16.msra.mxu0 %v700
    %805 = vmatpush.bf16.msra.mxu0 %v699
    %806 = vmatpush.bf16.msra.mxu0 %v698
    %807 = vmatpush.bf16.msra.mxu0 %v697
    %808 = vmatpush.bf16.msra.mxu0 %v696
    %809 = vmatmul.bf16.gmra.mxu0 %v461
    %v810 = vpop.f32.mrf.mxu0
    %v811 = vadd.f32 %v762, %v810
    %v812 = vpop.f32.mrf.mxu0
    %v813 = vadd.f32 %v764, %v812
    %814 = vmatmul.bf16.gmra.mxu0 %v465
    %v815 = vpop.f32.mrf.mxu0
    %v816 = vadd.f32 %v767, %v815
    %v817 = vpop.f32.mrf.mxu0
    %v818 = vadd.f32 %v769, %v817
    %819 = vmatmul.bf16.gmra.mxu0 %v469
    %v820 = vpop.f32.mrf.mxu0
    %v821 = vadd.f32 %v772, %v820
    %v822 = vpop.f32.mrf.mxu0
    %v823 = vadd.f32 %v774, %v822
    %824 = vmatmul.bf16.gmra.mxu0 %v473
    %v825 = vpop.f32.mrf.mxu0
    %v826 = vadd.f32 %v777, %v825
    %v827 = vpop.f32.mrf.mxu0
    %v828 = vadd.f32 %v779, %v827
    %829 = vmatmul.bf16.gmra.mxu0 %v477
    %v830 = vpop.f32.mrf.mxu0
    %v831 = vadd.f32 %v782, %v830
    %v832 = vpop.f32.mrf.mxu0
    %v833 = vadd.f32 %v784, %v832
    %834 = vmatmul.bf16.gmra.mxu0 %v481
    %v835 = vpop.f32.mrf.mxu0
    %v836 = vadd.f32 %v787, %v835
    %v837 = vpop.f32.mrf.mxu0
    %v838 = vadd.f32 %v789, %v837
    %839 = vmatmul.bf16.gmra.mxu0 %v485
    %v840 = vpop.f32.mrf.mxu0
    %v841 = vadd.f32 %v792, %v840
    %v842 = vpop.f32.mrf.mxu0
    %v843 = vadd.f32 %v794, %v842
    %844 = vmatmul.bf16.gmra.mxu0 %v489
    %v845 = vpop.f32.mrf.mxu0
    %v846 = vadd.f32 %v797, %v845
    %v847 = vpop.f32.mrf.mxu0
    %v848 = vadd.f32 %v799, %v847
    %849 = vdwg.mxu0
    %850 = vmatpush.bf16.msra.mxu0 %v711
    %851 = vmatpush.bf16.msra.mxu0 %v710
    %852 = vmatpush.bf16.msra.mxu0 %v709
    %853 = vmatpush.bf16.msra.mxu0 %v708
    %854 = vmatpush.bf16.msra.mxu0 %v707
    %855 = vmatpush.bf16.msra.mxu0 %v706
    %856 = vmatpush.bf16.msra.mxu0 %v705
    %857 = vmatpush.bf16.msra.mxu0 %v704
    %858 = vmatmul.bf16.gmra.mxu0 %v462
    %v859 = vpop.f32.mrf.mxu0
    %v860 = vadd.f32 %v811, %v859
    %v861 = vpop.f32.mrf.mxu0
    %v862 = vadd.f32 %v813, %v861
    %863 = vmatmul.bf16.gmra.mxu0 %v466
    %v864 = vpop.f32.mrf.mxu0
    %v865 = vadd.f32 %v816, %v864
    %v866 = vpop.f32.mrf.mxu0
    %v867 = vadd.f32 %v818, %v866
    %868 = vmatmul.bf16.gmra.mxu0 %v470
    %v869 = vpop.f32.mrf.mxu0
    %v870 = vadd.f32 %v821, %v869
    %v871 = vpop.f32.mrf.mxu0
    %v872 = vadd.f32 %v823, %v871
    %873 = vmatmul.bf16.gmra.mxu0 %v474
    %v874 = vpop.f32.mrf.mxu0
    %v875 = vadd.f32 %v826, %v874
    %v876 = vpop.f32.mrf.mxu0
    %v877 = vadd.f32 %v828, %v876
    %878 = vmatmul.bf16.gmra.mxu0 %v478
    %v879 = vpop.f32.mrf.mxu0
    %v880 = vadd.f32 %v831, %v879
    %v881 = vpop.f32.mrf.mxu0
    %v882 = vadd.f32 %v833, %v881
    %883 = vmatmul.bf16.gmra.mxu0 %v482
    %v884 = vpop.f32.mrf.mxu0
    %v885 = vadd.f32 %v836, %v884
    %v886 = vpop.f32.mrf.mxu0
    %v887 = vadd.f32 %v838, %v886
    %888 = vmatmul.bf16.gmra.mxu0 %v486
    %v889 = vpop.f32.mrf.mxu0
    %v890 = vadd.f32 %v841, %v889
    %v891 = vpop.f32.mrf.mxu0
    %v892 = vadd.f32 %v843, %v891
    %893 = vmatmul.bf16.gmra.mxu0 %v490
    %v894 = vpop.f32.mrf.mxu0
    %v895 = vadd.f32 %v846, %v894
    %v896 = vpop.f32.mrf.mxu0
    %v897 = vadd.f32 %v848, %v896
    %898 = vdwg.mxu0
    %899 = vmatpush.bf16.msra.mxu0 %v719
    %900 = vmatpush.bf16.msra.mxu0 %v718
    %901 = vmatpush.bf16.msra.mxu0 %v717
    %902 = vmatpush.bf16.msra.mxu0 %v716
    %903 = vmatpush.bf16.msra.mxu0 %v715
    %904 = vmatpush.bf16.msra.mxu0 %v714
    %905 = vmatpush.bf16.msra.mxu0 %v713
    %906 = vmatpush.bf16.msra.mxu0 %v712
    %907 = vmatmul.bf16.gmra.mxu0 %v463
    %v908 = vpop.f32.mrf.mxu0
    %v909 = vadd.f32 %v860, %v908
    %v910 = vpop.f32.mrf.mxu0
    %v911 = vadd.f32 %v862, %v910
    %912 = vmatmul.bf16.gmra.mxu0 %v467
    %v913 = vpop.f32.mrf.mxu0
    %v914 = vadd.f32 %v865, %v913
    %v915 = vpop.f32.mrf.mxu0
    %v916 = vadd.f32 %v867, %v915
    %917 = vmatmul.bf16.gmra.mxu0 %v471
    %v918 = vpop.f32.mrf.mxu0
    %v919 = vadd.f32 %v870, %v918
    %v920 = vpop.f32.mrf.mxu0
    %v921 = vadd.f32 %v872, %v920
    %922 = vmatmul.bf16.gmra.mxu0 %v475
    %v923 = vpop.f32.mrf.mxu0
    %v924 = vadd.f32 %v875, %v923
    %v925 = vpop.f32.mrf.mxu0
    %v926 = vadd.f32 %v877, %v925
    %927 = vmatmul.bf16.gmra.mxu0 %v479
    %v928 = vpop.f32.mrf.mxu0
    %v929 = vadd.f32 %v880, %v928
    %v930 = vpop.f32.mrf.mxu0
    %v931 = vadd.f32 %v882, %v930
    %932 = vmatmul.bf16.gmra.mxu0 %v483
    %v933 = vpop.f32.mrf.mxu0
    %v934 = vadd.f32 %v885, %v933
    %v935 = vpop.f32.mrf.mxu0
    %v936 = vadd.f32 %v887, %v935
    %937 = vmatmul.bf16.gmra.mxu0 %v487
    %v938 = vpop.f32.mrf.mxu0
    %v939 = vadd.f32 %v890, %v938
    %v940 = vpop.f32.mrf.mxu0
    %v941 = vadd.f32 %v892, %v940
    %942 = vmatmul.bf16.gmra.mxu0 %v491
    %v943 = vpop.f32.mrf.mxu0
    %v944 = vadd.f32 %v895, %v943
    %v945 = vpop.f32.mrf.mxu0
    %v946 = vadd.f32 %v897, %v945
    %947 = vdwg.mxu0
    %v948 = vmax.f32 %v909, 0.0
    %v949 = vmax.f32 %v911, 0.0
    %v950 = vmax.f32 %v914, 0.0
    %v951 = vmax.f32 %v916, 0.0
    %v952 = vmax.f32 %v919, 0.0
    %v953 = vmax.f32 %v921, 0.0
    %v954 = vmax.f32 %v924, 0.0
    %v955 = vmax.f32 %v926, 0.0
    %v956 = vmax.f32 %v929, 0.0
    %v957 = vmax.f32 %v931, 0.0
    %v958 = vmax.f32 %v934, 0.0
    %v959 = vmax.f32 %v936, 0.0
    %v960 = vmax.f32 %v939, 0.0
    %v961 = vmax.f32 %v941, 0.0
    %v962 = vmax.f32 %v944, 0.0
    %v963 = vmax.f32 %v946, 0.0
    %v964 = vpack.c.bf16 %v949, %v948
    %v965 = vpack.c.bf16 %v951, %v950
    %v966 = vpack.c.bf16 %v953, %v952
    %v967 = vpack.c.bf16 %v955, %v954
    %v968 = vpack.c.bf16 %v957, %v956
    %v969 = vpack.c.bf16 %v959, %v958
    %v970 = vpack.c.bf16 %v961, %v960
    %v971 = vpack.c.bf16 %v963, %v962
    %v972 = vld [vmem:[%s5] sm:$0xf]
    %v973 = vld [vmem:[%s5 + $0x4] sm:$0xf]
    %v974 = vld [vmem:[%s5 + $0x8] sm:$0xf]
    %v975 = vld [vmem:[%s5 + $0xc] sm:$0xf]
    %v976 = vld [vmem:[%s5 + $0x10] sm:$0xf]
    %v977 = vld [vmem:[%s5 + $0x14] sm:$0xf]
    %v978 = vld [vmem:[%s5 + $0x18] sm:$0xf]
    %v979 = vld [vmem:[%s5 + $0x1c] sm:$0xf]
    %v980 = vld [vmem:[%s5 + $0x20] sm:$0xf]
    %v981 = vld [vmem:[%s5 + $0x24] sm:$0xf]
    %v982 = vld [vmem:[%s5 + $0x28] sm:$0xf]
    %v983 = vld [vmem:[%s5 + $0x2c] sm:$0xf]
    %v984 = vld [vmem:[%s5 + $0x30] sm:$0xf]
    %v985 = vld [vmem:[%s5 + $0x34] sm:$0xf]
    %v986 = vld [vmem:[%s5 + $0x38] sm:$0xf]
    %v987 = vld [vmem:[%s5 + $0x3c] sm:$0xf]
    %v988 = vld [vmem:[%s6] sm:$0x1]
    %v990 = vperm.slane %v988, 0
    %v1008 = vunpack.c.l.b16 %v972
    %v1009 = vunpack.c.l.b16 %v973
    %v1010 = vunpack.c.l.b16 %v974
    %v1011 = vunpack.c.l.b16 %v975
    %v1012 = vunpack.c.l.b16 %v976
    %v1013 = vunpack.c.l.b16 %v977
    %v1014 = vunpack.c.l.b16 %v978
    %v1015 = vunpack.c.l.b16 %v979
    %v1016 = vunpack.c.l.b16 %v980
    %v1017 = vunpack.c.l.b16 %v981
    %v1018 = vunpack.c.l.b16 %v982
    %v1019 = vunpack.c.l.b16 %v983
    %v1020 = vunpack.c.l.b16 %v984
    %v1021 = vunpack.c.l.b16 %v985
    %v1022 = vunpack.c.l.b16 %v986
    %v1023 = vunpack.c.l.b16 %v987
    %v1024 = vpack.c.b16 %v1009, %v1008
    %v1025 = vpack.c.b16 %v1011, %v1010
    %v1026 = vpack.c.b16 %v1013, %v1012
    %v1027 = vpack.c.b16 %v1015, %v1014
    %v1028 = vpack.c.b16 %v1017, %v1016
    %v1029 = vpack.c.b16 %v1019, %v1018
    %v1030 = vpack.c.b16 %v1021, %v1020
    %v1031 = vpack.c.b16 %v1023, %v1022
    %1040 = vmatpush.bf16.msra.mxu0 %v1031
    %1041 = vmatpush.bf16.msra.mxu0 %v1030
    %1042 = vmatpush.bf16.msra.mxu0 %v1029
    %1043 = vmatpush.bf16.msra.mxu0 %v1028
    %1044 = vmatpush.bf16.msra.mxu0 %v1027
    %1045 = vmatpush.bf16.msra.mxu0 %v1026
    %1046 = vmatpush.bf16.msra.mxu0 %v1025
    %1047 = vmatpush.bf16.msra.mxu0 %v1024
    %1048 = vmatmul.bf16.gmra.mxu0 %v964
    %v1049 = vpop.f32.mrf.mxu0
    %v1050 = vadd.f32 %v990, %v1049
    %v1051 = vpop.f32.mrf.mxu0
    %v1052 = vadd.f32 %v990, %v1051
    %1053 = vmatmul.bf16.gmra.mxu0 %v965
    %v1054 = vpop.f32.mrf.mxu0
    %v1055 = vadd.f32 %v990, %v1054
    %v1056 = vpop.f32.mrf.mxu0
    %v1057 = vadd.f32 %v990, %v1056
    %1058 = vmatmul.bf16.gmra.mxu0 %v966
    %v1059 = vpop.f32.mrf.mxu0
    %v1060 = vadd.f32 %v990, %v1059
    %v1061 = vpop.f32.mrf.mxu0
    %v1062 = vadd.f32 %v990, %v1061
    %1063 = vmatmul.bf16.gmra.mxu0 %v967
    %v1064 = vpop.f32.mrf.mxu0
    %v1065 = vadd.f32 %v990, %v1064
    %v1066 = vpop.f32.mrf.mxu0
    %v1067 = vadd.f32 %v990, %v1066
    %1068 = vmatmul.bf16.gmra.mxu0 %v968
    %v1069 = vpop.f32.mrf.mxu0
    %v1070 = vadd.f32 %v990, %v1069
    %v1071 = vpop.f32.mrf.mxu0
    %v1072 = vadd.f32 %v990, %v1071
    %1073 = vmatmul.bf16.gmra.mxu0 %v969
    %v1074 = vpop.f32.mrf.mxu0
    %v1075 = vadd.f32 %v990, %v1074
    %v1076 = vpop.f32.mrf.mxu0
    %v1077 = vadd.f32 %v990, %v1076
    %1078 = vmatmul.bf16.gmra.mxu0 %v970
    %v1079 = vpop.f32.mrf.mxu0
    %v1080 = vadd.f32 %v990, %v1079
    %v1081 = vpop.f32.mrf.mxu0
    %v1082 = vadd.f32 %v990, %v1081
    %1083 = vmatmul.bf16.gmra.mxu0 %v971
    %v1084 = vpop.f32.mrf.mxu0
    %v1085 = vadd.f32 %v990, %v1084
    %v1086 = vpop.f32.mrf.mxu0
    %v1087 = vadd.f32 %v990, %v1086
    %1088 = vdwg.mxu0
    %1089 = vst [vmem:[#allocation7] sm:$0xff] %v1050
    %1090 = vst [vmem:[#allocation7 + $0x8] sm:$0xff] %v1052
    %1091 = vst [vmem:[#allocation7 + $0x10] sm:$0xff] %v1055
    %1092 = vst [vmem:[#allocation7 + $0x18] sm:$0xff] %v1057
    %1093 = vst [vmem:[#allocation7 + $0x20] sm:$0xff] %v1060
    %1094 = vst [vmem:[#allocation7 + $0x28] sm:$0xff] %v1062
    %1095 = vst [vmem:[#allocation7 + $0x30] sm:$0xff] %v1065
    %1096 = vst [vmem:[#allocation7 + $0x38] sm:$0xff] %v1067
    %1097 = vst [vmem:[#allocation7 + $0x40] sm:$0xff] %v1070
    %1098 = vst [vmem:[#allocation7 + $0x48] sm:$0xff] %v1072
    %1099 = vst [vmem:[#allocation7 + $0x50] sm:$0xff] %v1075
    %1100 = vst [vmem:[#allocation7 + $0x58] sm:$0xff] %v1077
    %1101 = vst [vmem:[#allocation7 + $0x60] sm:$0xff] %v1080
    %1102 = vst [vmem:[#allocation7 + $0x68] sm:$0xff] %v1082
    %1103 = vst [vmem:[#allocation7 + $0x70] sm:$0xff] %v1085
    %1104 = vst [vmem:[#allocation7 + $0x78] sm:$0xff] %v1087
    // Predicated region
    $region38: #{tpu_custom_call.1} parent=1 // pred_check
      _
    $region39: #{tpu_custom_call.1} parent=1 // pred_check_branch
      %1106 = sbr.rel (0) target = $region41
    $region40: #{tpu_custom_call.1} parent=1 // pred_region
      %1108 = vsyncadd [#allocation4], 0
      %s1109 = sshll.u32 [#allocation7], 4
      %s1110 = int_to_ptr.vmem [resolvable:$true] %s1109
      %s1111 = sshll.u32 %s7, 4
      %s1112 = int_to_ptr.hbm [resolvable:$true] %s1111
      %1117 = dma.vmem_to_hbm [thread:$0]  %s1110, 2048, %s1112, [#allocation4], 128, 128, 8
    $region41: #{tpu_custom_call.1} parent=1 // pred_fallthru
      _
    // Predicated region
    $region42: #{tpu_custom_call.1} parent=1 // pred_check
      _
    $region43: #{tpu_custom_call.1} parent=1 // pred_check_branch
      %1119 = sbr.rel (0) target = $region45
    $region44: #{tpu_custom_call.1} parent=1 // pred_region
      %1121 = dma.done [#allocation4], 2048
    $region45: #{tpu_custom_call.1} parent=1 // pred_fallthru
      _
    %1122 = vsyncpa [#allocation3], 1
    %1123 = vsyncpa [#allocation6], 1
    %1124 = vsyncpa [#allocation4], 1

</llo_original>
